<compile_context>
chip_gen: v5e
topology: v5e:2x2
jax: 0.10.0
libtpu: 0.0.40
codegen_flags: <defaults>
</compile_context>

<pallas_src>
import jax
import jax.numpy as jnp
from jax.experimental import pallas as pl
from jax.experimental.pallas import tpu as pltpu


# ----------------------------------------------------------------------------
# Fused kernel: per-plane Encoder_Feature_Linear (PT planes per grid step)
#               + incremental Encoder_OCD head.
# ----------------------------------------------------------------------------
def _fused_encoder_kernel(x_ref, fw1_ref, fb1_ref, fw2_ref, fb2_ref,
                          w1_ref, b1_ref, w2_ref, b2_ref, w3_ref,
                          o_ref, acc_ref):
    # x_ref  : (PT, B, C)     bf16   per-plane activations for this plane tile
    # fw1_ref: (PT, H1, C)    bf16   per-plane linear1 weights (lane dim = C)
    # fb1_ref: (PT, 1, H1)    f32
    # fw2_ref: (PT, OUT, H1)  bf16   per-plane linear2 weights (transposed)
    # fb2_ref: (PT, OUT, 1)   f32
    # w1_ref : (PT*OUT, D1)   bf16   row slice of ocd_linear1 weight
    # b1_ref : (1, D1) f32 ; w2_ref : (D1, D2) bf16 ; b2_ref : (1, D2) f32
    # w3_ref : (D2, D3) bf16 ; o_ref : (B, D3) f32 ; acc_ref : (B, D1) f32
    t = pl.program_id(0)

    @pl.when(t == 0)
    def _():
        acc_ref[...] = jnp.zeros_like(acc_ref)

    # --- Encoder_Feature_Linear for PT planes at once (batch dim = plane) ---
    # linear1 + ReLU:  (PT,B,C) x (PT,H1,C) -> (PT,B,H1), contraction on C.
    h = jnp.einsum("pbc,phc->pbh", x_ref[...], fw1_ref[...],
                   preferred_element_type=jnp.float32)
    h = jnp.maximum(h + fb1_ref[...], 0.0).astype(jnp.bfloat16)
    # linear2 + ReLU, produced (plane, out, batch)-major so the flatten below
    # is a sublane-aligned reshape:  (PT,OUT,H1) x (PT,B,H1) -> (PT,OUT,B).
    f = jnp.einsum("poh,pbh->pob", fw2_ref[...], h,
                   preferred_element_type=jnp.float32)
    f = jnp.maximum(f + fb2_ref[...], 0.0)                 # (PT, OUT, B) f32

    # --- head contribution: one matmul over K = PT*OUT ---
    # flat[b, p*OUT + o] = f[p, o, b];  OUT == 8 == the f32 sublane tile, so
    # (PT, OUT, B) -> (PT*OUT, B) keeps the lane dim and is layout-cheap.
    pt, out, b = f.shape
    flat = jnp.transpose(f.reshape(pt * out, b)).astype(jnp.bfloat16)  # (B, PT*OUT)
    acc_ref[...] += jnp.dot(flat, w1_ref[...],
                            preferred_element_type=jnp.float32)

    # --- head epilogue: only on the last grid step ---
    @pl.when(t == pl.num_programs(0) - 1)
    def _():
        h1 = jnp.maximum(acc_ref[...] + b1_ref[...], 0.0).astype(jnp.bfloat16)
        h2 = jnp.dot(h1, w2_ref[...], preferred_element_type=jnp.float32)
        h2 = jnp.maximum(h2 + b2_ref[...], 0.0).astype(jnp.bfloat16)
        y = jnp.dot(h2, w3_ref[...], preferred_element_type=jnp.float32)
        o_ref[...] = jnp.clip(y, 0.0, 6.0).astype(o_ref.dtype)   # ReLU6


def _pick_plane_tile(P):
    # Prefer ~4 grid steps: big enough tiles to amortize the ~0.35 us/step
    # overhead, small enough to double-buffer comfortably on v5e (16 MiB
    # scoped default) and v7x (64 MiB physical).  Real model P=196 -> 49.
    for pt in (49, 64, 56, 98, 32, 28, 16, 14, 8, 7, 4, 2, 1):
        if P % pt == 0:
            return pt
    return 1


def duv_encoder_ocd(x_pbc, params, *, pt=None):
    P, B, C = x_pbc.shape
    H1 = params["fw1"].shape[1]
    OUT = params["fw2"].shape[1]
    D1 = params["w1"].shape[-1]
    D2 = params["w2"].shape[-1]
    D3 = params["w3"].shape[-1]
    if pt is None:
        pt = _pick_plane_tile(P)
    assert P % pt == 0, (P, pt)

    return pl.pallas_call(
        _fused_encoder_kernel,
        out_shape=jax.ShapeDtypeStruct((B, D3), jnp.float32),
        grid=(P // pt,),
        in_specs=[
            pl.BlockSpec((pt, B, C), lambda t: (t, 0, 0)),       # x
            pl.BlockSpec((pt, H1, C), lambda t: (t, 0, 0)),      # fw1 (lane=C)
            pl.BlockSpec((pt, 1, H1), lambda t: (t, 0, 0)),      # fb1
            pl.BlockSpec((pt, OUT, H1), lambda t: (t, 0, 0)),    # fw2 (transposed)
            pl.BlockSpec((pt, OUT, 1), lambda t: (t, 0, 0)),     # fb2 (transposed)
            pl.BlockSpec((pt * OUT, D1), lambda t: (t, 0)),      # w1 (row slice)
            pl.BlockSpec((1, D1), lambda t: (0, 0)),             # b1 (resident)
            pl.BlockSpec((D1, D2), lambda t: (0, 0)),            # w2 (resident)
            pl.BlockSpec((1, D2), lambda t: (0, 0)),             # b2 (resident)
            pl.BlockSpec((D2, D3), lambda t: (0, 0)),            # w3 (resident)
        ],
        out_specs=pl.BlockSpec((B, D3), lambda t: (0, 0)),
        scratch_shapes=[pltpu.VMEM((B, D1), jnp.float32)],
        compiler_params=pltpu.CompilerParams(
            dimension_semantics=("arbitrary",),    # grid axis carries the accumulator
            vmem_limit_bytes=32 * 1024 * 1024),    # covers pt=49/98 on v5e..v7x
    )(x_pbc, params["fw1"], params["fb1"], params["fw2"], params["fb2"],
      params["w1"], params["b1"], params["w2"], params["b2"], params["w3"])


# ----------------------------------------------------------------------------
# Parameter construction (deterministic, synthetic).  Weights in bf16 (halves
# the dominant weight-DMA traffic), biases / accumulation in f32.  Weights are
# stored directly in the math orientation used by the kernel (contraction dim
# is the trailing/lane dim; w1 rows are plane-major, out-minor).
# ----------------------------------------------------------------------------
def init_params(key, *, C, P, OUT, H1, D1, D2, D3):
    ks = jax.random.split(key, 9)
    scale = 0.05
    bf16, f32 = jnp.bfloat16, jnp.float32
    return {
        # per-plane Encoder_Feature_Linear stacks (distinct weights per plane)
        "fw1": (jax.random.normal(ks[0], (P, H1, C), f32) * scale).astype(bf16),
        "fb1": jax.random.normal(ks[1], (P, 1, H1), f32) * scale,
        "fw2": (jax.random.normal(ks[2], (P, OUT, H1), f32) * scale).astype(bf16),
        "fb2": jax.random.normal(ks[3], (P, OUT, 1), f32) * scale,
        # OCD head
        "w1": (jax.random.normal(ks[4], (P * OUT, D1), f32) * scale).astype(bf16),
        "b1": jax.random.normal(ks[5], (1, D1), f32) * scale,
        "w2": (jax.random.normal(ks[6], (D1, D2), f32) * scale).astype(bf16),
        "b2": jax.random.normal(ks[7], (1, D2), f32) * scale,
        "w3": (jax.random.normal(ks[8], (D2, D3), f32) * scale).astype(bf16),
    }


# ----------------------------------------------------------------------------
# DUVModel forward (post-backbone): reshape -> fused Encoder_OCD kernel
# ----------------------------------------------------------------------------
def duv_model_forward(feat_nchw, params, *, pt=None):
    B, C, H, W = feat_nchw.shape
    P = H * W
    # torch.reshape(x, (B, C, -1)) -> (B, C, P); plane-major (P, B, C) for the
    # plane-tiled grid.  Activations cast to bf16 (matmuls accumulate in f32).
    x_pbc = jnp.transpose(feat_nchw.reshape(B, C, P), (2, 0, 1)).astype(jnp.bfloat16)
    return duv_encoder_ocd(x_pbc, params, pt=pt)


# ----------------------------------------------------------------------------
# Pure-JAX reference (mirrors the kernel's bf16/f32 numerics)
# ----------------------------------------------------------------------------
def duv_model_reference(feat_nchw, params):
    B, C, H, W = feat_nchw.shape
    P = H * W
    x = jnp.transpose(feat_nchw.reshape(B, C, P), (2, 0, 1)).astype(jnp.bfloat16)
    h = jnp.einsum("pbc,phc->pbh", x, params["fw1"],
                   preferred_element_type=jnp.float32)
    h = jnp.maximum(h + params["fb1"], 0.0).astype(jnp.bfloat16)
    f = jnp.einsum("pbh,poh->pbo", h, params["fw2"],
                   preferred_element_type=jnp.float32)
    f = jnp.maximum(f + jnp.transpose(params["fb2"], (0, 2, 1)), 0.0)  # (P,B,OUT)
    OUT = f.shape[-1]
    flat = jnp.transpose(f, (1, 0, 2)).reshape(B, P * OUT).astype(jnp.bfloat16)
    h1 = jnp.maximum(jnp.dot(flat, params["w1"], preferred_element_type=jnp.float32)
                     + params["b1"], 0.0).astype(jnp.bfloat16)
    h2 = jnp.maximum(jnp.dot(h1, params["w2"], preferred_element_type=jnp.float32)
                     + params["b2"], 0.0).astype(jnp.bfloat16)
    y = jnp.dot(h2, params["w3"], preferred_element_type=jnp.float32)
    return jnp.clip(y, 0.0, 6.0)


if __name__ == "__main__":
    # Small shapes consistent with the module structure
    # (real model: C=512, H=W=14 -> P=196, OUT=8, H1=32, D1=512, D2=256, D3=6,
    #  default plane tile 49 -> 4 grid steps)
    B, C, H, W = 2, 32, 4, 4
    P = H * W
    OUT = 8
    H1 = OUT * 4
    D1, D2, D3 = 64, 32, 6
    PT = 4   # 4 grid steps -> exercises cross-step accumulation + epilogue

    key = jax.random.PRNGKey(0)
    k_x, k_p = jax.random.split(key)
    feat = jax.random.normal(k_x, (B, C, H, W), jnp.float32)
    params = init_params(k_p, C=C, P=P, OUT=OUT, H1=H1, D1=D1, D2=D2, D3=D3)

    out = jax.block_until_ready(duv_model_forward(feat, params, pt=PT))
    ref = jax.block_until_ready(duv_model_reference(feat, params))

    assert out.shape == (B, D3), out.shape
    assert jnp.allclose(out, ref, atol=2e-3, rtol=2e-3), (
        "mismatch vs reference", float(jnp.max(jnp.abs(out - ref))))

    print("KERNEL_OK")
</pallas_src>

<mosaic_0001>
module attributes {stable_mosaic.version = 11 : i64} {
  func.func @_fused_encoder_kernel(%arg0: i32, %arg1: memref<4x2x32xbf16, #tpu.memory_space<vmem>>, %arg2: memref<4x32x32xbf16, #tpu.memory_space<vmem>>, %arg3: memref<4x1x32xf32, #tpu.memory_space<vmem>>, %arg4: memref<4x8x32xbf16, #tpu.memory_space<vmem>>, %arg5: memref<4x8x1xf32, #tpu.memory_space<vmem>>, %arg6: memref<32x64xbf16, #tpu.memory_space<vmem>>, %arg7: memref<1x64xf32, #tpu.memory_space<vmem>>, %arg8: memref<64x32xbf16, #tpu.memory_space<vmem>>, %arg9: memref<1x32xf32, #tpu.memory_space<vmem>>, %arg10: memref<32x6xbf16, #tpu.memory_space<vmem>>, %arg11: memref<2x6xf32, #tpu.memory_space<vmem>>, %arg12: memref<2x64xf32, #tpu.memory_space<vmem>>) attributes {dimension_semantics = [#tpu.dimension_semantics<arbitrary>], iteration_bounds = array<i64: 4>, scalar_prefetch = 0 : i64, scratch_operands = 1 : i64, tpu.core_type = #tpu.core_type<tc>, window_params = [{transform_indices = @transform_0, window_bounds = array<i64: 4, 2, 32>}, {transform_indices = @transform_1, window_bounds = array<i64: 4, 32, 32>}, {transform_indices = @transform_2, window_bounds = array<i64: 4, 1, 32>}, {transform_indices = @transform_3, window_bounds = array<i64: 4, 8, 32>}, {transform_indices = @transform_4, window_bounds = array<i64: 4, 8, 1>}, {transform_indices = @transform_5, window_bounds = array<i64: 32, 64>}, {pipeline_mode = #tpu.pipeline_mode<synchronous>, transform_indices = @transform_6, window_bounds = array<i64: 1, 64>}, {pipeline_mode = #tpu.pipeline_mode<synchronous>, transform_indices = @transform_7, window_bounds = array<i64: 64, 32>}, {pipeline_mode = #tpu.pipeline_mode<synchronous>, transform_indices = @transform_8, window_bounds = array<i64: 1, 32>}, {pipeline_mode = #tpu.pipeline_mode<synchronous>, transform_indices = @transform_9, window_bounds = array<i64: 32, 6>}, {pipeline_mode = #tpu.pipeline_mode<synchronous>, transform_indices = @transform_10, window_bounds = array<i64: 2, 6>}]} {
    %c0_i32 = arith.constant 0 : i32
    %0 = arith.cmpi eq, %arg0, %c0_i32 : i32
    %1 = arith.extui %0 : i1 to i32
    %c0_i32_0 = arith.constant 0 : i32
    %2 = arith.cmpi ne, %1, %c0_i32_0 : i32
    scf.if %2 {
      %cst_26 = arith.constant 0.000000e+00 : f32
      %30 = vector.broadcast %cst_26 : f32 to vector<2x64xf32>
      %c0_27 = arith.constant 0 : index
      %c0_28 = arith.constant 0 : index
      %31 = vector.load %arg12[%c0_27, %c0_28] : memref<2x64xf32, #tpu.memory_space<vmem>>, vector<2x64xf32>
      tpu.vector_store %arg12[%c0_27, %c0_28], %30 {strides = array<i32>} : memref<2x64xf32, #tpu.memory_space<vmem>>, vector<2x64xf32>,
    } else {
    }
    %c0 = arith.constant 0 : index
    %c0_1 = arith.constant 0 : index
    %c0_2 = arith.constant 0 : index
    %3 = vector.load %arg1[%c0, %c0_1, %c0_2] : memref<4x2x32xbf16, #tpu.memory_space<vmem>>, vector<4x2x32xbf16>
    %c0_3 = arith.constant 0 : index
    %c0_4 = arith.constant 0 : index
    %c0_5 = arith.constant 0 : index
    %4 = vector.load %arg2[%c0_3, %c0_4, %c0_5] : memref<4x32x32xbf16, #tpu.memory_space<vmem>>, vector<4x32x32xbf16>
    "tpu.trace_start"() <{level = 10 : i32, message = "pbc,phc->pbh"}> : () -> ()
    %cst = arith.constant dense<0.000000e+00> : vector<4x2x32xf32>
    %5 = tpu.matmul %3, %4, %cst {dimension_numbers = #tpu.dot_dimension_numbers<[2], [2], [1], [1], [0, 0, 0, 1, 1, 1], [0], [0]>} : vector<4x2x32xbf16>, vector<4x32x32xbf16>, vector<4x2x32xf32> -> vector<4x2x32xf32>
    "tpu.trace_stop"() : () -> ()
    %c0_6 = arith.constant 0 : index
    %c0_7 = arith.constant 0 : index
    %c0_8 = arith.constant 0 : index
    %6 = vector.load %arg3[%c0_6, %c0_7, %c0_8] : memref<4x1x32xf32, #tpu.memory_space<vmem>>, vector<4x1x32xf32>
    %7 = vector.broadcast %6 : vector<4x1x32xf32> to vector<4x2x32xf32>
    %8 = arith.addf %5, %7 : vector<4x2x32xf32>
    %cst_9 = arith.constant 0.000000e+00 : f32
    %9 = vector.broadcast %cst_9 : f32 to vector<4x2x32xf32>
    %10 = arith.maximumf %8, %9 : vector<4x2x32xf32>
    %11 = arith.truncf %10 : vector<4x2x32xf32> to vector<4x2x32xbf16>
    %c0_10 = arith.constant 0 : index
    %c0_11 = arith.constant 0 : index
    %c0_12 = arith.constant 0 : index
    %12 = vector.load %arg4[%c0_10, %c0_11, %c0_12] : memref<4x8x32xbf16, #tpu.memory_space<vmem>>, vector<4x8x32xbf16>
    "tpu.trace_start"() <{level = 10 : i32, message = "poh,pbh->pob"}> : () -> ()
    %cst_13 = arith.constant dense<0.000000e+00> : vector<4x8x2xf32>
    %13 = tpu.matmul %12, %11, %cst_13 {dimension_numbers = #tpu.dot_dimension_numbers<[2], [2], [1], [1], [0, 0, 0, 1, 1, 1], [0], [0]>} : vector<4x8x32xbf16>, vector<4x2x32xbf16>, vector<4x8x2xf32> -> vector<4x8x2xf32>
    "tpu.trace_stop"() : () -> ()
    %c0_14 = arith.constant 0 : index
    %c0_15 = arith.constant 0 : index
    %c0_16 = arith.constant 0 : index
    %14 = vector.load %arg5[%c0_14, %c0_15, %c0_16] : memref<4x8x1xf32, #tpu.memory_space<vmem>>, vector<4x8x1xf32>
    %15 = vector.broadcast %14 : vector<4x8x1xf32> to vector<4x8x2xf32>
    %16 = arith.addf %13, %15 : vector<4x8x2xf32>
    %cst_17 = arith.constant 0.000000e+00 : f32
    %17 = vector.broadcast %cst_17 : f32 to vector<4x8x2xf32>
    %18 = arith.maximumf %16, %17 : vector<4x8x2xf32>
    %19 = vector.shape_cast %18 : vector<4x8x2xf32> to vector<32x2xf32>
    %20 = tpu.transpose %19, [1, 0] : vector<32x2xf32> -> vector<2x32xf32>
    %21 = arith.truncf %20 : vector<2x32xf32> to vector<2x32xbf16>
    %c0_18 = arith.constant 0 : index
    %c0_19 = arith.constant 0 : index
    %22 = vector.load %arg12[%c0_18, %c0_19] : memref<2x64xf32, #tpu.memory_space<vmem>>, vector<2x64xf32>
    %c0_20 = arith.constant 0 : index
    %c0_21 = arith.constant 0 : index
    %23 = vector.load %arg6[%c0_20, %c0_21] : memref<32x64xbf16, #tpu.memory_space<vmem>>, vector<32x64xbf16>
    %cst_22 = arith.constant dense<0.000000e+00> : vector<2x64xf32>
    %24 = tpu.matmul %21, %23, %cst_22 {dimension_numbers = #tpu.dot_dimension_numbers<[1], [0], [0], [1], [0, 0, 1, 1], [], []>} : vector<2x32xbf16>, vector<32x64xbf16>, vector<2x64xf32> -> vector<2x64xf32>
    %25 = arith.addf %22, %24 : vector<2x64xf32>
    %c0_23 = arith.constant 0 : index
    %c0_24 = arith.constant 0 : index
    %26 = vector.load %arg12[%c0_23, %c0_24] : memref<2x64xf32, #tpu.memory_space<vmem>>, vector<2x64xf32>
    tpu.vector_store %arg12[%c0_23, %c0_24], %25 {strides = array<i32>} : memref<2x64xf32, #tpu.memory_space<vmem>>, vector<2x64xf32>,
    %c3_i32 = arith.constant 3 : i32
    %27 = arith.cmpi eq, %arg0, %c3_i32 : i32
    %28 = arith.extui %27 : i1 to i32
    %c0_i32_25 = arith.constant 0 : i32
    %29 = arith.cmpi ne, %28, %c0_i32_25 : i32
    scf.if %29 {
      %c0_26 = arith.constant 0 : index
      %c0_27 = arith.constant 0 : index
      %30 = vector.load %arg12[%c0_26, %c0_27] : memref<2x64xf32, #tpu.memory_space<vmem>>, vector<2x64xf32>
      %c0_28 = arith.constant 0 : index
      %c0_29 = arith.constant 0 : index
      %31 = vector.load %arg7[%c0_28, %c0_29] : memref<1x64xf32, #tpu.memory_space<vmem>>, vector<1x64xf32>
      %32 = vector.broadcast %31 : vector<1x64xf32> to vector<2x64xf32>
      %33 = arith.addf %30, %32 : vector<2x64xf32>
      %cst_30 = arith.constant 0.000000e+00 : f32
      %34 = vector.broadcast %cst_30 : f32 to vector<2x64xf32>
      %35 = arith.maximumf %33, %34 : vector<2x64xf32>
      %36 = arith.truncf %35 : vector<2x64xf32> to vector<2x64xbf16>
      %c0_31 = arith.constant 0 : index
      %c0_32 = arith.constant 0 : index
      %37 = vector.load %arg8[%c0_31, %c0_32] : memref<64x32xbf16, #tpu.memory_space<vmem>>, vector<64x32xbf16>
      %cst_33 = arith.constant dense<0.000000e+00> : vector<2x32xf32>
      %38 = tpu.matmul %36, %37, %cst_33 {dimension_numbers = #tpu.dot_dimension_numbers<[1], [0], [0], [1], [0, 0, 1, 1], [], []>} : vector<2x64xbf16>, vector<64x32xbf16>, vector<2x32xf32> -> vector<2x32xf32>
      %c0_34 = arith.constant 0 : index
      %c0_35 = arith.constant 0 : index
      %39 = vector.load %arg9[%c0_34, %c0_35] : memref<1x32xf32, #tpu.memory_space<vmem>>, vector<1x32xf32>
      %40 = vector.broadcast %39 : vector<1x32xf32> to vector<2x32xf32>
      %41 = arith.addf %38, %40 : vector<2x32xf32>
      %cst_36 = arith.constant 0.000000e+00 : f32
      %42 = vector.broadcast %cst_36 : f32 to vector<2x32xf32>
      %43 = arith.maximumf %41, %42 : vector<2x32xf32>
      %44 = arith.truncf %43 : vector<2x32xf32> to vector<2x32xbf16>
      %c0_37 = arith.constant 0 : index
      %c0_38 = arith.constant 0 : index
      %45 = vector.load %arg10[%c0_37, %c0_38] : memref<32x6xbf16, #tpu.memory_space<vmem>>, vector<32x6xbf16>
      %cst_39 = arith.constant dense<0.000000e+00> : vector<2x6xf32>
      %46 = tpu.matmul %44, %45, %cst_39 {dimension_numbers = #tpu.dot_dimension_numbers<[1], [0], [0], [1], [0, 0, 1, 1], [], []>} : vector<2x32xbf16>, vector<32x6xbf16>, vector<2x6xf32> -> vector<2x6xf32>
      %cst_40 = arith.constant 0.000000e+00 : f32
      %cst_41 = arith.constant 6.000000e+00 : f32
      %47 = vector.broadcast %cst_40 : f32 to vector<2x6xf32>
      %48 = arith.maximumf %47, %46 : vector<2x6xf32>
      %49 = vector.broadcast %cst_41 : f32 to vector<2x6xf32>
      %50 = arith.minimumf %49, %48 : vector<2x6xf32>
      %c0_42 = arith.constant 0 : index
      %c0_43 = arith.constant 0 : index
      %51 = vector.load %arg11[%c0_42, %c0_43] : memref<2x6xf32, #tpu.memory_space<vmem>>, vector<2x6xf32>
      tpu.vector_store %arg11[%c0_42, %c0_43], %50 {strides = array<i32>} : memref<2x6xf32, #tpu.memory_space<vmem>>, vector<2x6xf32>,
    } else {
    }
    return
  }
  func.func @transform_0(%arg0: i32) -> (i32, i32, i32) {
    %c0_i32 = arith.constant 0 : i32
    %c0_i32_0 = arith.constant 0 : i32
    %c0_i32_1 = arith.constant 0 : i32
    return %arg0, %c0_i32, %c0_i32_0 : i32, i32, i32
  }
  func.func @transform_1(%arg0: i32) -> (i32, i32, i32) {
    %c0_i32 = arith.constant 0 : i32
    %c0_i32_0 = arith.constant 0 : i32
    %c0_i32_1 = arith.constant 0 : i32
    return %arg0, %c0_i32, %c0_i32_0 : i32, i32, i32
  }
  func.func @transform_2(%arg0: i32) -> (i32, i32, i32) {
    %c0_i32 = arith.constant 0 : i32
    %c0_i32_0 = arith.constant 0 : i32
    %c0_i32_1 = arith.constant 0 : i32
    return %arg0, %c0_i32, %c0_i32_0 : i32, i32, i32
  }
  func.func @transform_3(%arg0: i32) -> (i32, i32, i32) {
    %c0_i32 = arith.constant 0 : i32
    %c0_i32_0 = arith.constant 0 : i32
    %c0_i32_1 = arith.constant 0 : i32
    return %arg0, %c0_i32, %c0_i32_0 : i32, i32, i32
  }
  func.func @transform_4(%arg0: i32) -> (i32, i32, i32) {
    %c0_i32 = arith.constant 0 : i32
    %c0_i32_0 = arith.constant 0 : i32
    %c0_i32_1 = arith.constant 0 : i32
    return %arg0, %c0_i32, %c0_i32_0 : i32, i32, i32
  }
  func.func @transform_5(%arg0: i32) -> (i32, i32) {
    %c0_i32 = arith.constant 0 : i32
    %c0_i32_0 = arith.constant 0 : i32
    return %arg0, %c0_i32 : i32, i32
  }
  func.func @transform_6(%arg0: i32) -> (i32, i32) {
    %c0_i32 = arith.constant 0 : i32
    %c0_i32_0 = arith.constant 0 : i32
    %c0_i32_1 = arith.constant 0 : i32
    return %c0_i32, %c0_i32_0 : i32, i32
  }
  func.func @transform_7(%arg0: i32) -> (i32, i32) {
    %c0_i32 = arith.constant 0 : i32
    %c0_i32_0 = arith.constant 0 : i32
    %c0_i32_1 = arith.constant 0 : i32
    return %c0_i32, %c0_i32_0 : i32, i32
  }
  func.func @transform_8(%arg0: i32) -> (i32, i32) {
    %c0_i32 = arith.constant 0 : i32
    %c0_i32_0 = arith.constant 0 : i32
    %c0_i32_1 = arith.constant 0 : i32
    return %c0_i32, %c0_i32_0 : i32, i32
  }
  func.func @transform_9(%arg0: i32) -> (i32, i32) {
    %c0_i32 = arith.constant 0 : i32
    %c0_i32_0 = arith.constant 0 : i32
    %c0_i32_1 = arith.constant 0 : i32
    return %c0_i32, %c0_i32_0 : i32, i32
  }
  func.func @transform_10(%arg0: i32) -> (i32, i32) {
    %c0_i32 = arith.constant 0 : i32
    %c0_i32_0 = arith.constant 0 : i32
    %c0_i32_1 = arith.constant 0 : i32
    return %c0_i32, %c0_i32_0 : i32, i32
  }
}

</mosaic_0001>

<llo_original>
// kernel: tpu_custom_call.1
$region0: #{tpu_custom_call.1}
  #allocation0 [shape = 'u32[]', space=smem, size = 0x4, offset = 0x4, fixed_abs, tag = 'smem constant byte address 0x4 - core index']
  #allocation1 [shape = 'u32[72,128]{1,0:T(1,128)}', space=vmem, size = 0x9000, scoped, tag = 'internal scratch']
  #allocation2 [shape = 'f32[2,64]{1,0:T(2,128)}', space=vmem, size = 0x400, scoped, tag = 'scratch operand']
  %s0 = inlined_call_operand.vmem [shape: bf16[16,2,32], index: 0, kind: input, shape index: {}]
  %s1 = inlined_call_operand.hbm [shape: bf16[16,32,32], index: 1, kind: input, shape index: {}]
  %s2 = inlined_call_operand.vmem [shape: f32[16,1,32], index: 2, kind: input, shape index: {}]
  %s3 = inlined_call_operand.vmem [shape: bf16[16,8,32], index: 3, kind: input, shape index: {}]
  %s4 = inlined_call_operand.vmem [shape: f32[16,8,1], index: 4, kind: input, shape index: {}]
  %s5 = inlined_call_operand.vmem [shape: bf16[128,64], index: 5, kind: input, shape index: {}]
  %s6 = inlined_call_operand.vmem [shape: f32[1,64], index: 6, kind: input, shape index: {}]
  %s7 = inlined_call_operand.vmem [shape: bf16[64,32], index: 7, kind: input, shape index: {}]
  %s8 = inlined_call_operand.vmem [shape: f32[1,32], index: 8, kind: input, shape index: {}]
  %s9 = inlined_call_operand.vmem [shape: bf16[32,6], index: 9, kind: input, shape index: {}]
  %s10 = inlined_call_operand.hbm [shape: f32[2,6], index: 10, kind: output, shape index: {}]
  %s11 = sld [smem:[#allocation0]]
  $region85: #{tpu_custom_call.1} parent=0
    _
  %s13 = ssub.s32 1, %s11
  %s14 = scalar_select 0, %s13, %s11
  $region1: #{tpu_custom_call.1} parent=0
    #allocation3 [shape = 'u8[65536]{0}', space=vmem, size = 0x10000, scoped, tag = 'input window, operand 1']
    #allocation4 [shape = 's32[2]{0}', space=sflag, size = 0x8, scoped, tag = 'scoped memory for tpu_custom_call.1']
    #allocation5 [shape = 's32[2]{0}', space=sflag, size = 0x8, scoped, tag = 'scoped memory for tpu_custom_call.1']
    #allocation6 [shape = 'u8[1024]{0}', space=vmem, size = 0x400, scoped, tag = 'output window, operand 0, single buffered']
    %15 = vsyncpa [#allocation4], 0
    %s16 = scalar_lea.sflag [#allocation4], 1
    %17 = vsyncpa %s16, 0
    %18 = vsyncpa [#allocation5], 0
    loop: start=0, step=1, limit=6
    $region2: #{tpu_custom_call.1} parent=1 // loop_pre_header
      _
    $region3: #{tpu_custom_call.1} parent=1 // loop_header
      %s20 = sphi 0, %s24
      %p21 = scmp.ge.s32.totalorder %s20, 6
      %s30 = sphi 0, %s32
      %s33 = sphi 0, %s30
      %s34 = sphi 0, %s33
      %s50 = sphi 0, %s34
      %s56 = sphi 0, %s58
      %s59 = sphi 0, %s56
      %s60 = sphi 0, %s59
      %s76 = sphi 0, %s60
      %s82 = sphi 0, %s84
      %s85 = sphi 0, %s82
      %s86 = sphi 0, %s85
      %s102 = sphi 0, %s86
      %s108 = sphi 0, %s110
      %s111 = sphi 0, %s108
      %s112 = sphi 0, %s111
      %s128 = sphi 0, %s112
      %s134 = sphi 0, %s136
      %s137 = sphi 0, %s134
      %s138 = sphi 0, %s137
      %s154 = sphi 0, %s138
      %s160 = sphi 0, %s162
      %s163 = sphi 0, %s160
      %s164 = sphi 0, %s163
      %s180 = sphi 0, %s164
      %s184 = sphi 0, %s184
      %s186 = sphi 0, %s184
      %s187 = sphi 0, %s186
      %s201 = sphi 0, %s187
      %s205 = sphi 0, %s205
      %s207 = sphi 0, %s205
      %s208 = sphi 0, %s207
      %s222 = sphi 0, %s208
      %s226 = sphi 0, %s226
      %s228 = sphi 0, %s226
      %s229 = sphi 0, %s228
      %s243 = sphi 0, %s229
      %s247 = sphi 0, %s247
      %s249 = sphi 0, %s247
      %s250 = sphi 0, %s249
      %s264 = sphi 0, %s250
      %s268 = sphi 0, %s268
      %s270 = sphi 0, %s268
      %s271 = sphi 0, %s270
      %s285 = sphi 0, %s271
    $region4: #{tpu_custom_call.1} parent=1 // loop_header_branch
      %23 = sbr.rel (%p21) target = $region8
    $region5: #{tpu_custom_call.1} parent=1 // loop_body
      %s25 = ssub.s32 %s20, 1
      %s26 = ssub.s32 %s20, 2
      %s27 = sadd.s32 %s20, 1
      %s28 = ssub.s32 %s20, %s27
      %p29 = scmp.eq.s32.totalorder %s28, 0
      %s31 = sadd.s32 %s30, 1
      %s32 = scalar_select %p29, %s30, %s31
      %p35 = pneg %p29
      %p36 = scmp.eq.s32.totalorder %s20, 3
      %p37 = por %p35, %p36
      %p38 = scmp.ne.s32.totalorder %s30, %s33
      %p39 = scmp.eq.s32.totalorder %s20, 0
      %p40 = por %p38, %p39
      %p41 = scmp.ne.s32.totalorder %s30, %s33
      %p42 = scmp.eq.s32.totalorder %s25, 3
      %p43 = por %p41, %p42
      %p44 = scmp.ne.s32.totalorder %s33, %s34
      %p45 = scmp.eq.s32.totalorder %s25, 0
      %p46 = por %p44, %p45
      %p47 = scmp.ne.s32.totalorder %s33, %s34
      %p48 = scmp.eq.s32.totalorder %s26, 3
      %p49 = por %p47, %p48
      %p51 = scmp.ne.s32.totalorder %s34, %s50
      %p52 = scmp.eq.s32.totalorder %s26, 0
      %p53 = por %p51, %p52
      %s54 = ssub.s32 %s20, %s27
      %p55 = scmp.eq.s32.totalorder %s54, 0
      %s57 = sadd.s32 %s56, 1
      %s58 = scalar_select %p55, %s56, %s57
      %p61 = pneg %p55
      %p62 = scmp.eq.s32.totalorder %s20, 3
      %p63 = por %p61, %p62
      %p64 = scmp.ne.s32.totalorder %s56, %s59
      %p65 = scmp.eq.s32.totalorder %s20, 0
      %p66 = por %p64, %p65
      %p67 = scmp.ne.s32.totalorder %s56, %s59
      %p68 = scmp.eq.s32.totalorder %s25, 3
      %p69 = por %p67, %p68
      %p70 = scmp.ne.s32.totalorder %s59, %s60
      %p71 = scmp.eq.s32.totalorder %s25, 0
      %p72 = por %p70, %p71
      %p73 = scmp.ne.s32.totalorder %s59, %s60
      %p74 = scmp.eq.s32.totalorder %s26, 3
      %p75 = por %p73, %p74
      %p77 = scmp.ne.s32.totalorder %s60, %s76
      %p78 = scmp.eq.s32.totalorder %s26, 0
      %p79 = por %p77, %p78
      %s80 = ssub.s32 %s20, %s27
      %p81 = scmp.eq.s32.totalorder %s80, 0
      %s83 = sadd.s32 %s82, 1
      %s84 = scalar_select %p81, %s82, %s83
      %p87 = pneg %p81
      %p88 = scmp.eq.s32.totalorder %s20, 3
      %p89 = por %p87, %p88
      %p90 = scmp.ne.s32.totalorder %s82, %s85
      %p91 = scmp.eq.s32.totalorder %s20, 0
      %p92 = por %p90, %p91
      %p93 = scmp.ne.s32.totalorder %s82, %s85
      %p94 = scmp.eq.s32.totalorder %s25, 3
      %p95 = por %p93, %p94
      %p96 = scmp.ne.s32.totalorder %s85, %s86
      %p97 = scmp.eq.s32.totalorder %s25, 0
      %p98 = por %p96, %p97
      %p99 = scmp.ne.s32.totalorder %s85, %s86
      %p100 = scmp.eq.s32.totalorder %s26, 3
      %p101 = por %p99, %p100
      %p103 = scmp.ne.s32.totalorder %s86, %s102
      %p104 = scmp.eq.s32.totalorder %s26, 0
      %p105 = por %p103, %p104
      %s106 = ssub.s32 %s20, %s27
      %p107 = scmp.eq.s32.totalorder %s106, 0
      %s109 = sadd.s32 %s108, 1
      %s110 = scalar_select %p107, %s108, %s109
      %p113 = pneg %p107
      %p114 = scmp.eq.s32.totalorder %s20, 3
      %p115 = por %p113, %p114
      %p116 = scmp.ne.s32.totalorder %s108, %s111
      %p117 = scmp.eq.s32.totalorder %s20, 0
      %p118 = por %p116, %p117
      %p119 = scmp.ne.s32.totalorder %s108, %s111
      %p120 = scmp.eq.s32.totalorder %s25, 3
      %p121 = por %p119, %p120
      %p122 = scmp.ne.s32.totalorder %s111, %s112
      %p123 = scmp.eq.s32.totalorder %s25, 0
      %p124 = por %p122, %p123
      %p125 = scmp.ne.s32.totalorder %s111, %s112
      %p126 = scmp.eq.s32.totalorder %s26, 3
      %p127 = por %p125, %p126
      %p129 = scmp.ne.s32.totalorder %s112, %s128
      %p130 = scmp.eq.s32.totalorder %s26, 0
      %p131 = por %p129, %p130
      %s132 = ssub.s32 %s20, %s27
      %p133 = scmp.eq.s32.totalorder %s132, 0
      %s135 = sadd.s32 %s134, 1
      %s136 = scalar_select %p133, %s134, %s135
      %p139 = pneg %p133
      %p140 = scmp.eq.s32.totalorder %s20, 3
      %p141 = por %p139, %p140
      %p142 = scmp.ne.s32.totalorder %s134, %s137
      %p143 = scmp.eq.s32.totalorder %s20, 0
      %p144 = por %p142, %p143
      %p145 = scmp.ne.s32.totalorder %s134, %s137
      %p146 = scmp.eq.s32.totalorder %s25, 3
      %p147 = por %p145, %p146
      %p148 = scmp.ne.s32.totalorder %s137, %s138
      %p149 = scmp.eq.s32.totalorder %s25, 0
      %p150 = por %p148, %p149
      %p151 = scmp.ne.s32.totalorder %s137, %s138
      %p152 = scmp.eq.s32.totalorder %s26, 3
      %p153 = por %p151, %p152
      %p155 = scmp.ne.s32.totalorder %s138, %s154
      %p156 = scmp.eq.s32.totalorder %s26, 0
      %p157 = por %p155, %p156
      %s158 = ssub.s32 %s20, %s27
      %p159 = scmp.eq.s32.totalorder %s158, 0
      %s161 = sadd.s32 %s160, 1
      %s162 = scalar_select %p159, %s160, %s161
      %p165 = pneg %p159
      %p166 = scmp.eq.s32.totalorder %s20, 3
      %p167 = por %p165, %p166
      %p168 = scmp.ne.s32.totalorder %s160, %s163
      %p169 = scmp.eq.s32.totalorder %s20, 0
      %p170 = por %p168, %p169
      %p171 = scmp.ne.s32.totalorder %s160, %s163
      %p172 = scmp.eq.s32.totalorder %s25, 3
      %p173 = por %p171, %p172
      %p174 = scmp.ne.s32.totalorder %s163, %s164
      %p175 = scmp.eq.s32.totalorder %s25, 0
      %p176 = por %p174, %p175
      %p177 = scmp.ne.s32.totalorder %s163, %s164
      %p178 = scmp.eq.s32.totalorder %s26, 3
      %p179 = por %p177, %p178
      %p181 = scmp.ne.s32.totalorder %s164, %s180
      %p182 = scmp.eq.s32.totalorder %s26, 0
      %p183 = por %p181, %p182
      %s185 = sadd.s32 %s184, 1
      %p188 = scmp.eq.s32.totalorder %s20, 3
      %p189 = scmp.ne.s32.totalorder %s184, %s186
      %p190 = scmp.eq.s32.totalorder %s20, 0
      %p191 = por %p189, %p190
      %p192 = scmp.ne.s32.totalorder %s184, %s186
      %p193 = scmp.eq.s32.totalorder %s25, 3
      %p194 = por %p192, %p193
      %p195 = scmp.ne.s32.totalorder %s186, %s187
      %p196 = scmp.eq.s32.totalorder %s25, 0
      %p197 = por %p195, %p196
      %p198 = scmp.ne.s32.totalorder %s186, %s187
      %p199 = scmp.eq.s32.totalorder %s26, 3
      %p200 = por %p198, %p199
      %p202 = scmp.ne.s32.totalorder %s187, %s201
      %p203 = scmp.eq.s32.totalorder %s26, 0
      %p204 = por %p202, %p203
      %s206 = sadd.s32 %s205, 1
      %p209 = scmp.eq.s32.totalorder %s20, 3
      %p210 = scmp.ne.s32.totalorder %s205, %s207
      %p211 = scmp.eq.s32.totalorder %s20, 0
      %p212 = por %p210, %p211
      %p213 = scmp.ne.s32.totalorder %s205, %s207
      %p214 = scmp.eq.s32.totalorder %s25, 3
      %p215 = por %p213, %p214
      %p216 = scmp.ne.s32.totalorder %s207, %s208
      %p217 = scmp.eq.s32.totalorder %s25, 0
      %p218 = por %p216, %p217
      %p219 = scmp.ne.s32.totalorder %s207, %s208
      %p220 = scmp.eq.s32.totalorder %s26, 3
      %p221 = por %p219, %p220
      %p223 = scmp.ne.s32.totalorder %s208, %s222
      %p224 = scmp.eq.s32.totalorder %s26, 0
      %p225 = por %p223, %p224
      %s227 = sadd.s32 %s226, 1
      %p230 = scmp.eq.s32.totalorder %s20, 3
      %p231 = scmp.ne.s32.totalorder %s226, %s228
      %p232 = scmp.eq.s32.totalorder %s20, 0
      %p233 = por %p231, %p232
      %p234 = scmp.ne.s32.totalorder %s226, %s228
      %p235 = scmp.eq.s32.totalorder %s25, 3
      %p236 = por %p234, %p235
      %p237 = scmp.ne.s32.totalorder %s228, %s229
      %p238 = scmp.eq.s32.totalorder %s25, 0
      %p239 = por %p237, %p238
      %p240 = scmp.ne.s32.totalorder %s228, %s229
      %p241 = scmp.eq.s32.totalorder %s26, 3
      %p242 = por %p240, %p241
      %p244 = scmp.ne.s32.totalorder %s229, %s243
      %p245 = scmp.eq.s32.totalorder %s26, 0
      %p246 = por %p244, %p245
      %s248 = sadd.s32 %s247, 1
      %p251 = scmp.eq.s32.totalorder %s20, 3
      %p252 = scmp.ne.s32.totalorder %s247, %s249
      %p253 = scmp.eq.s32.totalorder %s20, 0
      %p254 = por %p252, %p253
      %p255 = scmp.ne.s32.totalorder %s247, %s249
      %p256 = scmp.eq.s32.totalorder %s25, 3
      %p257 = por %p255, %p256
      %p258 = scmp.ne.s32.totalorder %s249, %s250
      %p259 = scmp.eq.s32.totalorder %s25, 0
      %p260 = por %p258, %p259
      %p261 = scmp.ne.s32.totalorder %s249, %s250
      %p262 = scmp.eq.s32.totalorder %s26, 3
      %p263 = por %p261, %p262
      %p265 = scmp.ne.s32.totalorder %s250, %s264
      %p266 = scmp.eq.s32.totalorder %s26, 0
      %p267 = por %p265, %p266
      %s269 = sadd.s32 %s268, 1
      %p272 = scmp.eq.s32.totalorder %s20, 3
      %p273 = scmp.ne.s32.totalorder %s268, %s270
      %p274 = scmp.eq.s32.totalorder %s20, 0
      %p275 = por %p273, %p274
      %p276 = scmp.ne.s32.totalorder %s268, %s270
      %p277 = scmp.eq.s32.totalorder %s25, 3
      %p278 = por %p276, %p277
      %p279 = scmp.ne.s32.totalorder %s270, %s271
      %p280 = scmp.eq.s32.totalorder %s25, 0
      %p281 = por %p279, %p280
      %p282 = scmp.ne.s32.totalorder %s270, %s271
      %p283 = scmp.eq.s32.totalorder %s26, 3
      %p284 = por %p282, %p283
      %p286 = scmp.ne.s32.totalorder %s271, %s285
      %p287 = scmp.eq.s32.totalorder %s26, 0
      %p288 = por %p286, %p287
      %p289 = scmp.le.s32.totalorder 1, %s20
      %p290 = scmp.lt.s32.totalorder %s20, 5
      %p291 = pnand %p289, %p290
      %p292 = pneg %p291
      // Predicated region
      $region9: #{tpu_custom_call.1} parent=5 // pred_check
        _
      $region10: #{tpu_custom_call.1} parent=5 // pred_check_branch
        %294 = sbr.rel (%p291) target = $region12
      $region11: #{tpu_custom_call.1} parent=5 // pred_region
        %s295 = ssub.s32 %s20, 1
        // Predicated region
        $region13: #{tpu_custom_call.1} parent=11 // pred_check
          %p296 = pneg %p197
        $region14: #{tpu_custom_call.1} parent=11 // pred_check_branch
          %298 = sbr.rel (%p296) target = $region16
        $region15: #{tpu_custom_call.1} parent=11 // pred_region
          _
        $region16: #{tpu_custom_call.1} parent=11 // pred_fallthru
          _
        // Predicated region
        $region17: #{tpu_custom_call.1} parent=11 // pred_check
          %p299 = pneg %p218
        $region18: #{tpu_custom_call.1} parent=11 // pred_check_branch
          %301 = sbr.rel (%p299) target = $region20
        $region19: #{tpu_custom_call.1} parent=11 // pred_region
          _
        $region20: #{tpu_custom_call.1} parent=11 // pred_fallthru
          _
        // Predicated region
        $region21: #{tpu_custom_call.1} parent=11 // pred_check
          %p302 = pneg %p239
        $region22: #{tpu_custom_call.1} parent=11 // pred_check_branch
          %304 = sbr.rel (%p302) target = $region24
        $region23: #{tpu_custom_call.1} parent=11 // pred_region
          _
        $region24: #{tpu_custom_call.1} parent=11 // pred_fallthru
          _
        // Predicated region
        $region25: #{tpu_custom_call.1} parent=11 // pred_check
          %p305 = pneg %p260
        $region26: #{tpu_custom_call.1} parent=11 // pred_check_branch
          %307 = sbr.rel (%p305) target = $region28
        $region27: #{tpu_custom_call.1} parent=11 // pred_region
          _
        $region28: #{tpu_custom_call.1} parent=11 // pred_fallthru
          _
      $region12: #{tpu_custom_call.1} parent=5 // pred_fallthru
        _
      %p308 = scmp.lt.s32.totalorder %s20, 4
      // Predicated region
      $region29: #{tpu_custom_call.1} parent=5 // pred_check
        %p309 = pneg %p308
      $region30: #{tpu_custom_call.1} parent=5 // pred_check_branch
        %311 = sbr.rel (%p309) target = $region32
      $region31: #{tpu_custom_call.1} parent=5 // pred_region
        // Predicated region
        $region33: #{tpu_custom_call.1} parent=31 // pred_check
          %p312 = pneg %p40
        $region34: #{tpu_custom_call.1} parent=31 // pred_check_branch
          %314 = sbr.rel (%p312) target = $region36
        $region35: #{tpu_custom_call.1} parent=31 // pred_region
          %s315 = smul.u32 4, %s20
          %p316 = scmp.lt.s32.totalorder %s315, 15
          %s317 = scalar_select %p316, %s315, 15
          %s318 = scalar_lea.vmem %s0, %s317
          %s319 = smul.u32 4, %s20
        $region36: #{tpu_custom_call.1} parent=31 // pred_fallthru
          _
        // Predicated region
        $region37: #{tpu_custom_call.1} parent=31 // pred_check
          %p320 = pneg %p66
        $region38: #{tpu_custom_call.1} parent=31 // pred_check_branch
          %322 = sbr.rel (%p320) target = $region40
        $region39: #{tpu_custom_call.1} parent=31 // pred_region
          %s323 = sand.u32 %s56, 1
          %s324 = scalar_lea.sflag [#allocation4], %s323
          %s325 = sand.u32 %s56, 1
          %s326 = smul.addr %s325, 64
          %s327 = scalar_lea.vmem [#allocation3], %s326
          %s328 = smul.u32 4, %s20
          %330 = vsyncadd %s324, 0
          %s331 = smul.addr %s328, 4
          %s332 = smul.addr %s331, 4
          %s333 = scalar_lea.hbm %s1, %s332
          %s334 = sshll.u32 %s333, 4
          %s335 = int_to_ptr.hbm [resolvable:$true] %s334
          %s336 = sshll.u32 %s327, 4
          %s337 = int_to_ptr.vmem [resolvable:$true] %s336
          %342 = dma.hbm_to_vmem [thread:$0]  %s335, 1024, %s337, %s324, 64, 64, 4
        $region40: #{tpu_custom_call.1} parent=31 // pred_fallthru
          _
        // Predicated region
        $region41: #{tpu_custom_call.1} parent=31 // pred_check
          %p343 = pneg %p92
        $region42: #{tpu_custom_call.1} parent=31 // pred_check_branch
          %345 = sbr.rel (%p343) target = $region44
        $region43: #{tpu_custom_call.1} parent=31 // pred_region
          %s346 = smul.u32 4, %s20
          %p347 = scmp.lt.s32.totalorder %s346, 15
          %s348 = scalar_select %p347, %s346, 15
          %s349 = scalar_lea.vmem %s2, %s348
          %s350 = smul.u32 4, %s20
        $region44: #{tpu_custom_call.1} parent=31 // pred_fallthru
          _
        // Predicated region
        $region45: #{tpu_custom_call.1} parent=31 // pred_check
          %p351 = pneg %p118
        $region46: #{tpu_custom_call.1} parent=31 // pred_check_branch
          %353 = sbr.rel (%p351) target = $region48
        $region47: #{tpu_custom_call.1} parent=31 // pred_region
          %s354 = smul.u32 4, %s20
          %p355 = scmp.lt.s32.totalorder %s354, 15
          %s356 = scalar_select %p355, %s354, 15
          %s357 = smul.addr %s356, 4
          %s358 = scalar_lea.vmem %s3, %s357
          %s359 = smul.u32 4, %s20
        $region48: #{tpu_custom_call.1} parent=31 // pred_fallthru
          _
        // Predicated region
        $region49: #{tpu_custom_call.1} parent=31 // pred_check
          %p360 = pneg %p144
        $region50: #{tpu_custom_call.1} parent=31 // pred_check_branch
          %362 = sbr.rel (%p360) target = $region52
        $region51: #{tpu_custom_call.1} parent=31 // pred_region
          %s363 = smul.u32 4, %s20
          %p364 = scmp.lt.s32.totalorder %s363, 15
          %s365 = scalar_select %p364, %s363, 15
          %s366 = smul.addr %s365, 8
          %s367 = scalar_lea.vmem %s4, %s366
          %s368 = smul.u32 4, %s20
        $region52: #{tpu_custom_call.1} parent=31 // pred_fallthru
          _
        // Predicated region
        $region53: #{tpu_custom_call.1} parent=31 // pred_check
          %p369 = pneg %p170
        $region54: #{tpu_custom_call.1} parent=31 // pred_check_branch
          %371 = sbr.rel (%p369) target = $region56
        $region55: #{tpu_custom_call.1} parent=31 // pred_region
          %s372 = smul.u32 4, %s20
          %p373 = scmp.lt.s32.totalorder %s372, 15
          %s374 = scalar_select %p373, %s372, 15
          %s375 = smul.addr %s374, 4
          %s376 = scalar_lea.vmem %s5, %s375
          %s377 = smul.u32 4, %s20
        $region56: #{tpu_custom_call.1} parent=31 // pred_fallthru
          _
      $region32: #{tpu_custom_call.1} parent=5 // pred_fallthru
        _
      %p378 = scmp.le.s32.totalorder 1, %s20
      %p379 = scmp.lt.s32.totalorder %s20, 5
      %p380 = pnand %p378, %p379
      %p381 = pneg %p380
      // Predicated region
      $region57: #{tpu_custom_call.1} parent=5 // pred_check
        _
      $region58: #{tpu_custom_call.1} parent=5 // pred_check_branch
        %383 = sbr.rel (%p380) target = $region60
      $region59: #{tpu_custom_call.1} parent=5 // pred_region
        %s384 = ssub.s32 %s20, 1
        %s385 = sand.u32 %s59, 1
        %s386 = scalar_lea.sflag [#allocation4], %s385
        %s387 = sand.u32 %s59, 1
        %s388 = smul.addr %s387, 64
        %s389 = scalar_lea.vmem [#allocation3], %s388
        // Predicated region
        $region61: #{tpu_custom_call.1} parent=59 // pred_check
          %p390 = pneg %p72
        $region62: #{tpu_custom_call.1} parent=59 // pred_check_branch
          %392 = sbr.rel (%p390) target = $region64
        $region63: #{tpu_custom_call.1} parent=59 // pred_region
          %394 = dma.done %s386, 1024
        $region64: #{tpu_custom_call.1} parent=59 // pred_fallthru
          _
        %s395 = smul.u32 4, %s25
        %p396 = scmp.lt.s32.totalorder %s395, 15
        %s397 = scalar_select %p396, %s395, 15
        %s398 = scalar_lea.vmem %s0, %s397
        %p399 = pneg %p46
        %p400 = pneg %p43
        %s401 = sand.u32 %s59, 1
        %s402 = scalar_lea.sflag [#allocation4], %s401
        %s403 = sand.u32 %s59, 1
        %s404 = smul.addr %s403, 64
        %s405 = scalar_lea.vmem [#allocation3], %s404
        %p406 = pneg %p72
        %p407 = pneg %p69
        %s408 = smul.u32 4, %s25
        %p409 = scmp.lt.s32.totalorder %s408, 15
        %s410 = scalar_select %p409, %s408, 15
        %s411 = scalar_lea.vmem %s2, %s410
        %p412 = pneg %p98
        %p413 = pneg %p95
        %s414 = smul.u32 4, %s25
        %p415 = scmp.lt.s32.totalorder %s414, 15
        %s416 = scalar_select %p415, %s414, 15
        %s417 = smul.addr %s416, 4
        %s418 = scalar_lea.vmem %s3, %s417
        %p419 = pneg %p124
        %p420 = pneg %p121
        %s421 = smul.u32 4, %s25
        %p422 = scmp.lt.s32.totalorder %s421, 15
        %s423 = scalar_select %p422, %s421, 15
        %s424 = smul.addr %s423, 8
        %s425 = scalar_lea.vmem %s4, %s424
        %p426 = pneg %p150
        %p427 = pneg %p147
        %s428 = smul.u32 4, %s25
        %p429 = scmp.lt.s32.totalorder %s428, 15
        %s430 = scalar_select %p429, %s428, 15
        %s431 = smul.addr %s430, 4
        %s432 = scalar_lea.vmem %s5, %s431
        %p433 = pneg %p176
        %p434 = pneg %p173
        %p435 = pneg %p197
        %p436 = pneg %p194
        %p437 = pneg %p218
        %p438 = pneg %p215
        %p439 = pneg %p239
        %p440 = pneg %p236
        %p441 = pneg %p260
        %p442 = pneg %p257
        %p443 = pneg %p281
        %p444 = pneg %p278
        %s445 = smul.u32 4, %s25
        %p446 = scmp.lt.s32.totalorder %s445, 15
        %s447 = scalar_select %p446, %s445, 15
        %s448 = scalar_lea.vmem %s0, %s447
        %s449 = smul.u32 4, %s25
        %s450 = smul.u32 4, %s25
        %s451 = smul.u32 4, %s25
        %p452 = scmp.lt.s32.totalorder %s451, 15
        %s453 = scalar_select %p452, %s451, 15
        %s454 = scalar_lea.vmem %s2, %s453
        %s455 = smul.u32 4, %s25
        %s456 = smul.u32 4, %s25
        %p457 = scmp.lt.s32.totalorder %s456, 15
        %s458 = scalar_select %p457, %s456, 15
        %s459 = smul.addr %s458, 4
        %s460 = scalar_lea.vmem %s3, %s459
        %s461 = smul.u32 4, %s25
        %s462 = smul.u32 4, %s25
        %p463 = scmp.lt.s32.totalorder %s462, 15
        %s464 = scalar_select %p463, %s462, 15
        %s465 = smul.addr %s464, 8
        %s466 = scalar_lea.vmem %s4, %s465
        %s467 = smul.u32 4, %s25
        %s468 = smul.u32 4, %s25
        %p469 = scmp.lt.s32.totalorder %s468, 15
        %s470 = scalar_select %p469, %s468, 15
        %s471 = smul.addr %s470, 4
        %s472 = scalar_lea.vmem %s5, %s471
        %s473 = smul.u32 4, %s25
        %p475 = scmp.eq.s32.totalorder %s25, 0
        // Predicated region
        $region65: #{tpu_custom_call.1} parent=59 // pred_check
          %p476 = pneg %p475
        $region66: #{tpu_custom_call.1} parent=59 // pred_check_branch
          %478 = sbr.rel (%p476) target = $region68
        $region67: #{tpu_custom_call.1} parent=59 // pred_region
          %vm479 = vcmask 517120
          %480 = vst.msk [vmem:[#allocation2] sm:$0x3] %vm479, 0.0
        $region68: #{tpu_custom_call.1} parent=59 // pred_fallthru
          _
        %v481 = vld [vmem:[%s448] sm:$0x1]
        %v482 = vld [vmem:[%s448 + $0x1] sm:$0x1]
        %v483 = vld [vmem:[%s448 + $0x2] sm:$0x1]
        %v484 = vld [vmem:[%s448 + $0x3] sm:$0x1]
        %v485 = vld [vmem:[%s389] sm:$0xf]
        %v486 = vld [vmem:[%s389 + $0x4] sm:$0xf]
        %v487 = vld [vmem:[%s389 + $0x8] sm:$0xf]
        %v488 = vld [vmem:[%s389 + $0xc] sm:$0xf]
        %v489 = vld [vmem:[%s389 + $0x10] sm:$0xf]
        %v490 = vld [vmem:[%s389 + $0x14] sm:$0xf]
        %v491 = vld [vmem:[%s389 + $0x18] sm:$0xf]
        %v492 = vld [vmem:[%s389 + $0x1c] sm:$0xf]
        %v493 = vld [vmem:[%s389 + $0x20] sm:$0xf]
        %v494 = vld [vmem:[%s389 + $0x24] sm:$0xf]
        %v495 = vld [vmem:[%s389 + $0x28] sm:$0xf]
        %v496 = vld [vmem:[%s389 + $0x2c] sm:$0xf]
        %v497 = vld [vmem:[%s389 + $0x30] sm:$0xf]
        %v498 = vld [vmem:[%s389 + $0x34] sm:$0xf]
        %v499 = vld [vmem:[%s389 + $0x38] sm:$0xf]
        %v500 = vld [vmem:[%s389 + $0x3c] sm:$0xf]
        %v501 = vld [vmem:[%s454] sm:$0x1]
        %v502 = vld [vmem:[%s454 + $0x1] sm:$0x1]
        %v503 = vld [vmem:[%s454 + $0x2] sm:$0x1]
        %v504 = vld [vmem:[%s454 + $0x3] sm:$0x1]
        %v509 = vperm.slane %v501, 0
        %v510 = vperm.slane %v502, 0
        %v511 = vperm.slane %v503, 0
        %v512 = vperm.slane %v504, 0
        %v521 = vunpack.c.l.b16 %v485
        %v522 = vunpack.c.l.b16 %v486
        %v523 = vunpack.c.l.b16 %v487
        %v524 = vunpack.c.l.b16 %v488
        %v525 = vpack.c.b16 %v522, %v521
        %v526 = vpack.c.b16 %v524, %v523
        %vm527 = vcmask 261120
        %v529 = vsel %vm527, %v481, 0
        %v532 = vsel %vm527, %v525, 0
        %v535 = vsel %vm527, %v526, 0
        %537 = vmatpush.bf16.xpose.msra.mxu0 0
        %538 = vmatpush.bf16.xpose.msra.mxu0 0
        %539 = vmatpush.bf16.xpose.msra.mxu0 0
        %540 = vmatpush.bf16.xpose.msra.mxu0 0
        %541 = vmatpush.bf16.xpose.msra.mxu0 0
        %542 = vmatpush.bf16.xpose.msra.mxu0 0
        %543 = vmatpush.bf16.xpose.msra.mxu0 %v535
        %544 = vmatpush.bf16.xpose.msra.mxu0 %v532
        %545 = vmatmul.bf16.gmra.mxu0 %v529
        %v546 = vpop.f32.mrf.mxu0
        %v547 = vadd.f32 %v509, %v546
        %v548 = vpop.f32.mrf.mxu0
        %549 = vdwg.mxu0
        %v554 = vunpack.c.l.b16 %v489
        %v555 = vunpack.c.l.b16 %v490
        %v556 = vunpack.c.l.b16 %v491
        %v557 = vunpack.c.l.b16 %v492
        %v558 = vpack.c.b16 %v555, %v554
        %v559 = vpack.c.b16 %v557, %v556
        %v561 = vsel %vm527, %v482, 0
        %v564 = vsel %vm527, %v558, 0
        %v567 = vsel %vm527, %v559, 0
        %569 = vmatpush.bf16.xpose.msra.mxu0 0
        %570 = vmatpush.bf16.xpose.msra.mxu0 0
        %571 = vmatpush.bf16.xpose.msra.mxu0 0
        %572 = vmatpush.bf16.xpose.msra.mxu0 0
        %573 = vmatpush.bf16.xpose.msra.mxu0 0
        %574 = vmatpush.bf16.xpose.msra.mxu0 0
        %575 = vmatpush.bf16.xpose.msra.mxu0 %v567
        %576 = vmatpush.bf16.xpose.msra.mxu0 %v564
        %577 = vmatmul.bf16.gmra.mxu0 %v561
        %v578 = vpop.f32.mrf.mxu0
        %v579 = vadd.f32 %v510, %v578
        %v580 = vpop.f32.mrf.mxu0
        %581 = vdwg.mxu0
        %v586 = vunpack.c.l.b16 %v493
        %v587 = vunpack.c.l.b16 %v494
        %v588 = vunpack.c.l.b16 %v495
        %v589 = vunpack.c.l.b16 %v496
        %v590 = vpack.c.b16 %v587, %v586
        %v591 = vpack.c.b16 %v589, %v588
        %v593 = vsel %vm527, %v483, 0
        %v596 = vsel %vm527, %v590, 0
        %v599 = vsel %vm527, %v591, 0
        %601 = vmatpush.bf16.xpose.msra.mxu0 0
        %602 = vmatpush.bf16.xpose.msra.mxu0 0
        %603 = vmatpush.bf16.xpose.msra.mxu0 0
        %604 = vmatpush.bf16.xpose.msra.mxu0 0
        %605 = vmatpush.bf16.xpose.msra.mxu0 0
        %606 = vmatpush.bf16.xpose.msra.mxu0 0
        %607 = vmatpush.bf16.xpose.msra.mxu0 %v599
        %608 = vmatpush.bf16.xpose.msra.mxu0 %v596
        %609 = vmatmul.bf16.gmra.mxu0 %v593
        %v610 = vpop.f32.mrf.mxu0
        %v611 = vadd.f32 %v511, %v610
        %v612 = vpop.f32.mrf.mxu0
        %613 = vdwg.mxu0
        %v618 = vunpack.c.l.b16 %v497
        %v619 = vunpack.c.l.b16 %v498
        %v620 = vunpack.c.l.b16 %v499
        %v621 = vunpack.c.l.b16 %v500
        %v622 = vpack.c.b16 %v619, %v618
        %v623 = vpack.c.b16 %v621, %v620
        %v625 = vsel %vm527, %v484, 0
        %v628 = vsel %vm527, %v622, 0
        %v631 = vsel %vm527, %v623, 0
        %633 = vmatpush.bf16.xpose.msra.mxu0 0
        %634 = vmatpush.bf16.xpose.msra.mxu0 0
        %635 = vmatpush.bf16.xpose.msra.mxu0 0
        %636 = vmatpush.bf16.xpose.msra.mxu0 0
        %637 = vmatpush.bf16.xpose.msra.mxu0 0
        %638 = vmatpush.bf16.xpose.msra.mxu0 0
        %639 = vmatpush.bf16.xpose.msra.mxu0 %v631
        %640 = vmatpush.bf16.xpose.msra.mxu0 %v628
        %641 = vmatmul.bf16.gmra.mxu0 %v625
        %v642 = vpop.f32.mrf.mxu0
        %v643 = vadd.f32 %v512, %v642
        %v644 = vpop.f32.mrf.mxu0
        %645 = vdwg.mxu0
        %v646 = vmax.f32 %v547, 0.0
        %v647 = vmax.f32 %v579, 0.0
        %v648 = vmax.f32 %v611, 0.0
        %v649 = vmax.f32 %v643, 0.0
        %v650 = vpack.c.bf16 %v646, %v646
        %v651 = vpack.c.bf16 %v647, %v647
        %v652 = vpack.c.bf16 %v648, %v648
        %v653 = vpack.c.bf16 %v649, %v649
        %v654 = vld [vmem:[%s460] sm:$0xf]
        %v655 = vld [vmem:[%s460 + $0x4] sm:$0xf]
        %v656 = vld [vmem:[%s460 + $0x8] sm:$0xf]
        %v657 = vld [vmem:[%s460 + $0xc] sm:$0xf]
        %v658 = vld [vmem:[%s466] sm:$0xff]
        %v659 = vld [vmem:[%s466 + $0x8] sm:$0xff]
        %v660 = vld [vmem:[%s466 + $0x10] sm:$0xff]
        %v661 = vld [vmem:[%s466 + $0x18] sm:$0xff]
        %663 = vset.pattern.permute.xlu0 0
        %664 = vperm.xlu0 %663, %v658
        %v665 = vpop.permute.xlu0 %664
        %668 = vset.pattern.permute.xlu0 0
        %669 = vperm.xlu0 %668, %v659
        %v670 = vpop.permute.xlu0 %669
        %673 = vset.pattern.permute.xlu0 0
        %674 = vperm.xlu0 %673, %v660
        %v675 = vpop.permute.xlu0 %674
        %678 = vset.pattern.permute.xlu0 0
        %679 = vperm.xlu0 %678, %v661
        %v680 = vpop.permute.xlu0 %679
        %v683 = vsel %vm527, %v654, 0
        %v686 = vsel %vm527, %v650, 0
        %688 = vmatpush.bf16.xpose.msra.mxu0 0
        %689 = vmatpush.bf16.xpose.msra.mxu0 0
        %690 = vmatpush.bf16.xpose.msra.mxu0 0
        %691 = vmatpush.bf16.xpose.msra.mxu0 0
        %692 = vmatpush.bf16.xpose.msra.mxu0 0
        %693 = vmatpush.bf16.xpose.msra.mxu0 0
        %694 = vmatpush.bf16.xpose.msra.mxu0 0
        %695 = vmatpush.bf16.xpose.msra.mxu0 %v686
        %696 = vmatmul.bf16.gmra.mxu0 %v683
        %v697 = vpop.f32.mrf.mxu0
        %v698 = vadd.f32 %v665, %v697
        %v699 = vpop.f32.mrf.mxu0
        %700 = vdwg.mxu0
        %v702 = vsel %vm527, %v655, 0
        %v705 = vsel %vm527, %v651, 0
        %707 = vmatpush.bf16.xpose.msra.mxu0 0
        %708 = vmatpush.bf16.xpose.msra.mxu0 0
        %709 = vmatpush.bf16.xpose.msra.mxu0 0
        %710 = vmatpush.bf16.xpose.msra.mxu0 0
        %711 = vmatpush.bf16.xpose.msra.mxu0 0
        %712 = vmatpush.bf16.xpose.msra.mxu0 0
        %713 = vmatpush.bf16.xpose.msra.mxu0 0
        %714 = vmatpush.bf16.xpose.msra.mxu0 %v705
        %715 = vmatmul.bf16.gmra.mxu0 %v702
        %v716 = vpop.f32.mrf.mxu0
        %v717 = vadd.f32 %v670, %v716
        %v718 = vpop.f32.mrf.mxu0
        %719 = vdwg.mxu0
        %v721 = vsel %vm527, %v656, 0
        %v724 = vsel %vm527, %v652, 0
        %726 = vmatpush.bf16.xpose.msra.mxu0 0
        %727 = vmatpush.bf16.xpose.msra.mxu0 0
        %728 = vmatpush.bf16.xpose.msra.mxu0 0
        %729 = vmatpush.bf16.xpose.msra.mxu0 0
        %730 = vmatpush.bf16.xpose.msra.mxu0 0
        %731 = vmatpush.bf16.xpose.msra.mxu0 0
        %732 = vmatpush.bf16.xpose.msra.mxu0 0
        %733 = vmatpush.bf16.xpose.msra.mxu0 %v724
        %734 = vmatmul.bf16.gmra.mxu0 %v721
        %v735 = vpop.f32.mrf.mxu0
        %v736 = vadd.f32 %v675, %v735
        %v737 = vpop.f32.mrf.mxu0
        %738 = vdwg.mxu0
        %v740 = vsel %vm527, %v657, 0
        %v743 = vsel %vm527, %v653, 0
        %745 = vmatpush.bf16.xpose.msra.mxu0 0
        %746 = vmatpush.bf16.xpose.msra.mxu0 0
        %747 = vmatpush.bf16.xpose.msra.mxu0 0
        %748 = vmatpush.bf16.xpose.msra.mxu0 0
        %749 = vmatpush.bf16.xpose.msra.mxu0 0
        %750 = vmatpush.bf16.xpose.msra.mxu0 0
        %751 = vmatpush.bf16.xpose.msra.mxu0 0
        %752 = vmatpush.bf16.xpose.msra.mxu0 %v743
        %753 = vmatmul.bf16.gmra.mxu0 %v740
        %v754 = vpop.f32.mrf.mxu0
        %v755 = vadd.f32 %v680, %v754
        %v756 = vpop.f32.mrf.mxu0
        %757 = vdwg.mxu0
        %v758 = vmax.f32 %v698, 0.0
        %v759 = vmax.f32 %v717, 0.0
        %v760 = vmax.f32 %v736, 0.0
        %v761 = vmax.f32 %v755, 0.0
        %762 = vxpose.xlu0.b32.start [1/16] %v758, 128
        %763 = vxpose.xlu0.b32.cont [2/16] %v759, 128
        %764 = vxpose.xlu0.b32.cont [3/16] %v760, 128
        %765 = vxpose.xlu0.b32.cont [4/16] %v761, 128
        %766 = vxpose.xlu0.b32.cont [5/16] 0.0, 128
        %767 = vxpose.xlu0.b32.cont [6/16] 0.0, 128
        %768 = vxpose.xlu0.b32.cont [7/16] 0.0, 128
        %769 = vxpose.xlu0.b32.cont [8/16] 0.0, 128
        %770 = vxpose.xlu0.b32.cont [9/16] 0.0, 128
        %771 = vxpose.xlu0.b32.cont [10/16] 0.0, 128
        %772 = vxpose.xlu0.b32.cont [11/16] 0.0, 128
        %773 = vxpose.xlu0.b32.cont [12/16] 0.0, 128
        %774 = vxpose.xlu0.b32.cont [13/16] 0.0, 128
        %775 = vxpose.xlu0.b32.cont [14/16] 0.0, 128
        %776 = vxpose.xlu0.b32.cont [15/16] 0.0, 128
        %777 = vxpose.xlu0.b32.end [16/16] 0.0, 128
        %v778 = vpop.trf.xlu0
        %v779 = vpop.trf.xlu0
        %v780 = vpop.trf.xlu0
        %v781 = vpop.trf.xlu0
        %v782 = vpop.trf.xlu0
        %v783 = vpop.trf.xlu0
        %v784 = vpop.trf.xlu0
        %v785 = vpop.trf.xlu0
        %v786 = vpop.trf.xlu0
        %v787 = vpop.trf.xlu0
        %v788 = vpop.trf.xlu0
        %v789 = vpop.trf.xlu0
        %v790 = vpop.trf.xlu0
        %v791 = vpop.trf.xlu0
        %v792 = vpop.trf.xlu0
        %v793 = vpop.trf.xlu0
        %v794 = vpack.c.bf16 %v778, %v778
        %v795 = vld [vmem:[#allocation2] sm:$0x3]
        %v796 = vld [vmem:[%s472] sm:$0xf]
        %v797 = vld [vmem:[%s472 + $0x4] sm:$0xf]
        %v798 = vld [vmem:[%s472 + $0x8] sm:$0xf]
        %v799 = vld [vmem:[%s472 + $0xc] sm:$0xf]
        %v804 = vunpack.c.l.b16 %v796
        %v805 = vunpack.c.l.b16 %v797
        %v806 = vunpack.c.l.b16 %v798
        %v807 = vunpack.c.l.b16 %v799
        %v808 = vpack.c.b16 %v805, %v804
        %v809 = vpack.c.b16 %v807, %v806
        %v813 = vsel %vm527, %v794, 0
        %815 = vmatpush.bf16.msra.mxu0 0
        %816 = vmatpush.bf16.msra.mxu0 0
        %817 = vmatpush.bf16.msra.mxu0 0
        %818 = vmatpush.bf16.msra.mxu0 0
        %819 = vmatpush.bf16.msra.mxu0 0
        %820 = vmatpush.bf16.msra.mxu0 0
        %821 = vmatpush.bf16.msra.mxu0 %v809
        %822 = vmatpush.bf16.msra.mxu0 %v808
        %823 = vmatmul.bf16.gmra.mxu0 %v813
        %v824 = vpop.f32.mrf.mxu0
        %v825 = vadd.f32 0.0, %v824
        %v826 = vpop.f32.mrf.mxu0
        %827 = vdwg.mxu0
        %v828 = vadd.f32 %v795, %v825
        %vm829 = vcmask 517120
        %830 = vst.msk [vmem:[#allocation2] sm:$0x3] %vm829, %v828
        %p831 = scmp.eq.s32.totalorder %s25, 3
        // Predicated region
        $region69: #{tpu_custom_call.1} parent=59 // pred_check
          %p832 = pneg %p831
        $region70: #{tpu_custom_call.1} parent=59 // pred_check_branch
          %834 = sbr.rel (%p832) target = $region72
        $region71: #{tpu_custom_call.1} parent=59 // pred_region
          %v835 = vld [vmem:[#allocation2] sm:$0x3]
          %v836 = vld [vmem:[%s6] sm:$0x1]
          %v838 = vperm.slane %v836, 0
          %v840 = vadd.f32 %v835, %v838
          %v841 = vmax.f32 %v840, 0.0
          %v842 = vpack.c.bf16 %v841, %v841
          %v843 = vld [vmem:[%s7] sm:$0xf]
          %v844 = vld [vmem:[%s7 + $0x4] sm:$0xf]
          %v845 = vld [vmem:[%s7 + $0x8] sm:$0xf]
          %v846 = vld [vmem:[%s7 + $0xc] sm:$0xf]
          %v847 = vld [vmem:[%s7 + $0x10] sm:$0xf]
          %v848 = vld [vmem:[%s7 + $0x14] sm:$0xf]
          %v849 = vld [vmem:[%s7 + $0x18] sm:$0xf]
          %v850 = vld [vmem:[%s7 + $0x1c] sm:$0xf]
          %v851 = vld [vmem:[%s8] sm:$0x1]
          %v853 = vperm.slane %v851, 0
          %v863 = vunpack.c.l.b16 %v843
          %v864 = vunpack.c.l.b16 %v844
          %v865 = vunpack.c.l.b16 %v845
          %v866 = vunpack.c.l.b16 %v846
          %v867 = vunpack.c.l.b16 %v847
          %v868 = vunpack.c.l.b16 %v848
          %v869 = vunpack.c.l.b16 %v849
          %v870 = vunpack.c.l.b16 %v850
          %v871 = vpack.c.b16 %v864, %v863
          %v872 = vpack.c.b16 %v866, %v865
          %v873 = vpack.c.b16 %v868, %v867
          %v874 = vpack.c.b16 %v870, %v869
          %vm879 = vcmask 523264
          %v881 = vsel %vm879, %v842, 0
          %883 = vmatpush.bf16.msra.mxu0 0
          %884 = vmatpush.bf16.msra.mxu0 0
          %885 = vmatpush.bf16.msra.mxu0 0
          %886 = vmatpush.bf16.msra.mxu0 0
          %887 = vmatpush.bf16.msra.mxu0 %v874
          %888 = vmatpush.bf16.msra.mxu0 %v873
          %889 = vmatpush.bf16.msra.mxu0 %v872
          %890 = vmatpush.bf16.msra.mxu0 %v871
          %891 = vmatmul.bf16.gmra.mxu0 %v881
          %v892 = vpop.f32.mrf.mxu0
          %v893 = vadd.f32 %v853, %v892
          %v894 = vpop.f32.mrf.mxu0
          %895 = vdwg.mxu0
          %v896 = vmax.f32 %v893, 0.0
          %v897 = vpack.c.bf16 %v896, %v896
          %v898 = vld [vmem:[%s9] sm:$0xf]
          %v899 = vld [vmem:[%s9 + $0x4] sm:$0xf]
          %v900 = vld [vmem:[%s9 + $0x8] sm:$0xf]
          %v901 = vld [vmem:[%s9 + $0xc] sm:$0xf]
          %v906 = vunpack.c.l.b16 %v898
          %v907 = vunpack.c.l.b16 %v899
          %v908 = vunpack.c.l.b16 %v900
          %v909 = vunpack.c.l.b16 %v901
          %v910 = vpack.c.b16 %v907, %v906
          %v911 = vpack.c.b16 %v909, %v908
          %v915 = vsel %vm527, %v897, 0
          %917 = vmatpush.bf16.msra.mxu0 0
          %918 = vmatpush.bf16.msra.mxu0 0
          %919 = vmatpush.bf16.msra.mxu0 0
          %920 = vmatpush.bf16.msra.mxu0 0
          %921 = vmatpush.bf16.msra.mxu0 0
          %922 = vmatpush.bf16.msra.mxu0 0
          %923 = vmatpush.bf16.msra.mxu0 %v911
          %924 = vmatpush.bf16.msra.mxu0 %v910
          %925 = vmatmul.bf16.gmra.mxu0 %v915
          %v926 = vpop.f32.mrf.mxu0
          %v927 = vadd.f32 0.0, %v926
          %v928 = vpop.f32.mrf.mxu0
          %929 = vdwg.mxu0
          %v930 = vmax.f32 %v927, 0.0
          %v931 = vmin.f32 %v930, 6.0
          %vm932 = vcmask 41984
          %933 = vst.msk [vmem:[#allocation6] sm:$0x3] %vm932, %v931
        $region72: #{tpu_custom_call.1} parent=59 // pred_fallthru
          _
        // Predicated region
        $region73: #{tpu_custom_call.1} parent=59 // pred_check
          %p934 = pneg %p278
        $region74: #{tpu_custom_call.1} parent=59 // pred_check_branch
          %936 = sbr.rel (%p934) target = $region76
        $region75: #{tpu_custom_call.1} parent=59 // pred_region
          %938 = vsyncadd [#allocation5], 0
          %s940 = sshll.u32 [#allocation6], 4
          %s941 = int_to_ptr.vmem [resolvable:$true] %s940
          %s942 = sshll.u32 %s10, 4
          %s943 = int_to_ptr.hbm [resolvable:$true] %s942
          %945 = dma.vmem_to_hbm [thread:$0]  %s941, 32, %s943, [#allocation5]
        $region76: #{tpu_custom_call.1} parent=59 // pred_fallthru
          _
        // Predicated region
        $region77: #{tpu_custom_call.1} parent=59 // pred_check
          %p946 = pneg %p278
        $region78: #{tpu_custom_call.1} parent=59 // pred_check_branch
          %948 = sbr.rel (%p946) target = $region80
        $region79: #{tpu_custom_call.1} parent=59 // pred_region
          %950 = dma.done [#allocation5], 32
        $region80: #{tpu_custom_call.1} parent=59 // pred_fallthru
          _
      $region60: #{tpu_custom_call.1} parent=5 // pred_fallthru
        _
      %p951 = scmp.le.s32.totalorder 2, %s20
      // Predicated region
      $region81: #{tpu_custom_call.1} parent=5 // pred_check
        %p952 = pneg %p951
      $region82: #{tpu_custom_call.1} parent=5 // pred_check_branch
        %954 = sbr.rel (%p952) target = $region84
      $region83: #{tpu_custom_call.1} parent=5 // pred_region
        %s955 = ssub.s32 %s20, 2
      $region84: #{tpu_custom_call.1} parent=5 // pred_fallthru
        _
    $region6: #{tpu_custom_call.1} parent=1 // loop_footer
      %s24 = sadd.s32 1, %s20
    $region7: #{tpu_custom_call.1} parent=1 // loop_footer_branch
      %19 = sbr.rel target = $region3
    $region8: #{tpu_custom_call.1} parent=1 // loop_exit
      _
    %956 = vsyncpa [#allocation4], 1
    %s957 = scalar_lea.sflag [#allocation4], 1
    %958 = vsyncpa %s957, 1
    %959 = vsyncpa [#allocation5], 1
    %s960 = scalar_lea.sflag [#allocation5], 1
    %961 = vsyncpa %s960, 1

</llo_original>
